<compile_context>
chip_gen: v7x
topology: tpu7x:2x2x1
jax: 0.10.0
libtpu: 0.0.40
codegen_flags: <defaults>
</compile_context>

<pallas_src>
import jax
import jax.numpy as jnp
from jax.experimental import pallas as pl
from jax.experimental.pallas import tpu as pltpu


def _round_up(x, m):
    return (x + m - 1) // m * m


def _pick_tile(total, max_tile, unit):
    """Largest multiple of `unit` that divides `total`, capped at `max_tile`."""
    t = min(total, max_tile)
    t -= t % unit
    while t > unit and total % t:
        t -= unit
    return max(t, unit)


def _vmem_capacity_bytes():
    try:
        cap = getattr(pltpu.get_tpu_info(), "vmem_capacity_bytes", None)
        if cap:
            return int(cap)
    except Exception:
        pass
    return 64 * 1024 * 1024  # conservative default (v7x)


# ---------------------------------------------------------------------------
# Kernel 1: key projection  uk = enc @ Ua + (bu + ba)   (decode-step invariant)
# ---------------------------------------------------------------------------
def _key_proj_kernel(enc_ref, ua_ref, bias_ref, uk_ref):
    uk = jnp.dot(enc_ref[...], ua_ref[...],
                 preferred_element_type=jnp.float32) + bias_ref[...]
    uk_ref[...] = uk.astype(jnp.bfloat16)


# ---------------------------------------------------------------------------
# Kernel 2: one decode step (attention + LSTM cell + FC head)
# ---------------------------------------------------------------------------
def _decoder_step_kernel(emb_ref, h0_ref, c0_ref, enc_ref, uk_ref,
                         wha_ref, va_ref, wx_ref, wc_ref, bg_ref,
                         wfc_ref, bfc_ref,
                         pred_ref, h_out_ref, c_out_ref, attn_ref,
                         h_new_s):
    h2 = h0_ref.shape[-1]

    @pl.when(pl.program_id(1) == 0)
    def _():
        h0 = h0_ref[...]                                       # (Bt, H2)    f32
        c0 = c0_ref[...]                                       # (Bt, H2)    f32
        enc = enc_ref[...]                                     # (Bt, S, H2) bf16
        uk = uk_ref[...]                                       # (Bt, S, H2) bf16
        h0_b = h0.astype(jnp.bfloat16)

        # fused hidden matmul: [gates_h | wq] = h0 @ [wh | wa]
        hmix = jnp.dot(h0_b, wha_ref[...],
                       preferred_element_type=jnp.float32)     # (Bt, 5*H2)
        gates_h = hmix[:, :4 * h2]
        wq = hmix[:, 4 * h2:]

        # ---- Bahdanau attention (ba + bu already folded into uk) ----
        t = jnp.tanh(wq[:, None, :] + uk.astype(jnp.float32))  # (Bt, S, H2) f32
        scores = jnp.sum(t * va_ref[...][None, :, :], axis=-1) # (Bt, S)
        m = jnp.max(scores, axis=-1, keepdims=True)
        e = jnp.exp(scores - m)
        w = e * pl.reciprocal(jnp.sum(e, axis=-1, keepdims=True), approx=True)
        attn_ref[...] = w
        ctx = jnp.einsum('bqs,bsh->bqh',
                         w[:, None, :].astype(jnp.bfloat16), enc,
                         preferred_element_type=jnp.float32)[:, 0, :]  # (Bt, H2)

        # ---- single-step LSTM cell, gates (i|f|g|o) fused along lanes ----
        gates = (jnp.dot(emb_ref[...].astype(jnp.bfloat16), wx_ref[...],
                         preferred_element_type=jnp.float32)
                 + jnp.dot(ctx.astype(jnp.bfloat16), wc_ref[...],
                           preferred_element_type=jnp.float32)
                 + gates_h + bg_ref[...])                      # (Bt, 4*H2)
        i_g = jax.nn.sigmoid(gates[:, 0 * h2:1 * h2])
        f_g = jax.nn.sigmoid(gates[:, 1 * h2:2 * h2])
        g_g = jnp.tanh(gates[:, 2 * h2:3 * h2])
        o_g = jax.nn.sigmoid(gates[:, 3 * h2:4 * h2])

        c_new = f_g * c0 + i_g * g_g
        h_new = o_g * jnp.tanh(c_new)
        c_out_ref[...] = c_new
        h_out_ref[...] = h_new
        h_new_s[...] = h_new.astype(jnp.bfloat16)              # carried across O

    # ---- FC head tile (runs for every (b, o) grid point) ----
    pred_ref[...] = (jnp.dot(h_new_s[...], wfc_ref[...],
                             preferred_element_type=jnp.float32)
                     + bfc_ref[...])


# ---------------------------------------------------------------------------
# One-time preparation (hoisted out of the decode loop)
# ---------------------------------------------------------------------------
def prepare_params(params):
    O = params["wfc"].shape[-1]
    O_pad = _round_up(O, 128)
    return {
        "embeddings": params["embeddings"],
        "ua": params["ua"].astype(jnp.bfloat16),
        "attn_bias": params["bu"] + params["ba"],               # folded into uk
        "va": params["va"],
        "wha": jnp.concatenate([params["wh"], params["wa"]],
                               axis=1).astype(jnp.bfloat16),    # (H2, 5*H2)
        "wx": params["wx"].astype(jnp.bfloat16),
        "wc": params["wc"].astype(jnp.bfloat16),
        "bg": params["bg"],
        "wfc": jnp.pad(params["wfc"],
                       ((0, 0), (0, O_pad - O))).astype(jnp.bfloat16),
        "bfc": jnp.pad(params["bfc"], ((0, 0), (0, O_pad - O))),
        "out_dim": O,
    }


def precompute_encoder(encoder_outputs, prep):
    """Per-sequence work (invariant across decode steps): bf16 cast + Ua proj."""
    B, S, H2 = encoder_outputs.shape
    B_pad = _round_up(B, 16)
    enc_bf = jnp.pad(encoder_outputs,
                     ((0, B_pad - B), (0, 0), (0, 0))).astype(jnp.bfloat16)
    rows = B_pad * S                                            # multiple of 16
    row_tile = _pick_tile(rows, 1024, 16)
    uk_flat = pl.pallas_call(
        _key_proj_kernel,
        out_shape=jax.ShapeDtypeStruct((rows, H2), jnp.bfloat16),
        grid=(rows // row_tile,),
        in_specs=[
            pl.BlockSpec((row_tile, H2), lambda r: (r, 0)),
            pl.BlockSpec((H2, H2), lambda r: (0, 0)),
            pl.BlockSpec((1, H2), lambda r: (0, 0)),
        ],
        out_specs=pl.BlockSpec((row_tile, H2), lambda r: (r, 0)),
        compiler_params=pltpu.CompilerParams(
            dimension_semantics=("parallel",)),
    )(enc_bf.reshape(rows, H2), prep["ua"], prep["attn_bias"])
    return enc_bf, uk_flat.reshape(B_pad, S, H2)


# ---------------------------------------------------------------------------
# Per-step wrapper
# ---------------------------------------------------------------------------
def attn_decoder_step(X, decoder_hidden, decoder_cell, enc_bf, uk_bf, prep):
    B_pad, S, H2 = enc_bf.shape
    B = X.shape[0]
    Din = prep["embeddings"].shape[-1]
    O = prep["out_dim"]
    O_pad = prep["wfc"].shape[-1]

    # glue (XLA): embedding gather + batch padding
    emb = prep["embeddings"][X[:, 0]]                           # (B, Din)
    emb_p = jnp.pad(emb, ((0, B_pad - B), (0, 0)))
    h0_p = jnp.pad(decoder_hidden[0], ((0, B_pad - B), (0, 0)))
    c0_p = jnp.pad(decoder_cell[0], ((0, B_pad - B), (0, 0)))

    # ---- tile sizes sized to the device's VMEM (64 MiB v7x / 128 MiB v5e,v6e)
    vmem_cap = _vmem_capacity_bytes()
    vmem_limit = max(32 * 1024 * 1024,
                     min(vmem_cap * 3 // 4, 96 * 1024 * 1024))
    budget = vmem_limit - (4 << 20)

    def footprint(bt, ot):
        f32, bf16 = 4, 2
        per = (bt * Din * f32 + 2 * bt * H2 * f32               # emb, h0, c0
               + 2 * bt * S * H2 * bf16                         # enc, uk
               + 5 * H2 * H2 * bf16 + H2 * f32                  # wha, va
               + (Din + H2) * 4 * H2 * bf16 + 4 * H2 * f32      # wx, wc, bg
               + H2 * ot * bf16 + ot * f32                      # wfc, bfc
               + bt * ot * f32 + 2 * bt * H2 * f32 + bt * S * f32)  # outputs
        return 2 * per + bt * H2 * 2                            # 2x buf + scratch

    B_TILE = _pick_tile(B_pad, 128, 8)
    O_TILE = _pick_tile(O_pad, 2048, 128)
    while footprint(B_TILE, O_TILE) > budget and O_TILE > 128:
        O_TILE = _pick_tile(O_pad, O_TILE // 2, 128)
    while footprint(B_TILE, O_TILE) > budget and B_TILE > 8:
        B_TILE = _pick_tile(B_pad, B_TILE // 2, 8)

    out_shapes = (
        jax.ShapeDtypeStruct((B_pad, O_pad), jnp.float32),      # prediction
        jax.ShapeDtypeStruct((B_pad, H2), jnp.float32),         # new hidden
        jax.ShapeDtypeStruct((B_pad, H2), jnp.float32),         # new cell
        jax.ShapeDtypeStruct((B_pad, S), jnp.float32),          # attn weights
    )
    pred_p, h_new_p, c_new_p, attn_p = pl.pallas_call(
        _decoder_step_kernel,
        out_shape=out_shapes,
        grid=(B_pad // B_TILE, O_pad // O_TILE),
        in_specs=[
            pl.BlockSpec((B_TILE, Din), lambda b, o: (b, 0)),        # emb
            pl.BlockSpec((B_TILE, H2), lambda b, o: (b, 0)),         # h0
            pl.BlockSpec((B_TILE, H2), lambda b, o: (b, 0)),         # c0
            pl.BlockSpec((B_TILE, S, H2), lambda b, o: (b, 0, 0)),   # enc (bf16)
            pl.BlockSpec((B_TILE, S, H2), lambda b, o: (b, 0, 0)),   # uk  (bf16)
            pl.BlockSpec((H2, 5 * H2), lambda b, o: (0, 0)),         # [wh|wa]
            pl.BlockSpec((1, H2), lambda b, o: (0, 0)),              # va
            pl.BlockSpec((Din, 4 * H2), lambda b, o: (0, 0)),        # wx
            pl.BlockSpec((H2, 4 * H2), lambda b, o: (0, 0)),         # wc
            pl.BlockSpec((1, 4 * H2), lambda b, o: (0, 0)),          # bg
            pl.BlockSpec((H2, O_TILE), lambda b, o: (0, o)),         # wfc
            pl.BlockSpec((1, O_TILE), lambda b, o: (0, o)),          # bfc
        ],
        out_specs=(
            pl.BlockSpec((B_TILE, O_TILE), lambda b, o: (b, o)),
            pl.BlockSpec((B_TILE, H2), lambda b, o: (b, 0)),
            pl.BlockSpec((B_TILE, H2), lambda b, o: (b, 0)),
            pl.BlockSpec((B_TILE, S), lambda b, o: (b, 0)),
        ),
        scratch_shapes=[pltpu.VMEM((B_TILE, H2), jnp.bfloat16)],
        compiler_params=pltpu.CompilerParams(
            dimension_semantics=("parallel", "arbitrary"),
            vmem_limit_bytes=int(vmem_limit)),
    )(emb_p, h0_p, c0_p, enc_bf, uk_bf,
      prep["wha"], prep["va"], prep["wx"], prep["wc"], prep["bg"],
      prep["wfc"], prep["bfc"])

    # restore PyTorch shapes; slice off padding
    prediction = pred_p[:B, :O][:, None, :]          # (B, 1, O)
    new_hidden = h_new_p[:B][None]                   # (1, B, 2H)
    new_cell = c_new_p[:B][None]                     # (1, B, 2H)
    attn_weights = attn_p[:B][:, None, :]            # (B, 1, S)
    return prediction, new_hidden, new_cell, attn_weights


def attn_decoder_forward(X, decoder_hidden, decoder_cell, encoder_outputs, params):
    """Matches AttnDecoderRNN.forward.  In an autoregressive loop, call
    prepare_params / precompute_encoder once and attn_decoder_step per token."""
    prep = prepare_params(params)
    enc_bf, uk_bf = precompute_encoder(encoder_outputs, prep)
    return attn_decoder_step(X, decoder_hidden, decoder_cell, enc_bf, uk_bf, prep)


def init_params(key, vocab, input_dim, hidden_dim, output_dim):
    H2 = 2 * hidden_dim
    ks = jax.random.split(key, 11)
    scale = 0.1

    def rnd(k, shape):
        return (scale * jax.random.normal(k, shape)).astype(jnp.float32)

    return {
        "embeddings": rnd(ks[0], (vocab, input_dim)),
        # BahdanauAttention(2*hidden_dim): Linear weights pre-transposed (in, out).
        # Va's scalar bias is dropped: a constant per score cancels in softmax.
        "wa": rnd(ks[1], (H2, H2)), "ba": rnd(ks[2], (1, H2)),
        "ua": rnd(ks[3], (H2, H2)), "bu": rnd(ks[4], (1, H2)),
        "va": rnd(ks[5], (1, H2)),
        # LSTM(input_dim + 2H -> 2H): gates (i|f|g|o) fused along the output
        # axis; the concatenated LSTM input split into embedding (wx) and
        # context (wc) parts to avoid a lane-axis concatenate.
        "wx": rnd(ks[6], (input_dim, 4 * H2)),
        "wc": rnd(ks[7], (H2, 4 * H2)),
        "wh": rnd(ks[8], (H2, 4 * H2)),
        "bg": rnd(ks[9], (1, 4 * H2)),   # b_ih + b_hh combined
        # fc_layer: Linear(2H -> output_dim), pre-transposed
        "wfc": rnd(ks[10], (H2, output_dim)),
        "bfc": jnp.zeros((1, output_dim), jnp.float32),
    }


if __name__ == "__main__":
    B, S = 2, 8
    vocab, input_dim, hidden_dim, output_dim = 20, 32, 16, 16
    H2 = 2 * hidden_dim

    key = jax.random.PRNGKey(0)
    kp, kx, kh, kc, ke = jax.random.split(key, 5)

    params = init_params(kp, vocab, input_dim, hidden_dim, output_dim)

    X = jax.random.randint(kx, (B, 1), 0, vocab, dtype=jnp.int32)
    decoder_hidden = (0.1 * jax.random.normal(kh, (1, B, H2))).astype(jnp.float32)
    decoder_cell = (0.1 * jax.random.normal(kc, (1, B, H2))).astype(jnp.float32)
    encoder_outputs = (0.1 * jax.random.normal(ke, (B, S, H2))).astype(jnp.float32)

    pred, h_new, c_new, attn = attn_decoder_forward(
        X, decoder_hidden, decoder_cell, encoder_outputs, params)
    jax.block_until_ready((pred, h_new, c_new, attn))

    assert pred.shape == (B, 1, output_dim)
    assert h_new.shape == (1, B, H2) and c_new.shape == (1, B, H2)
    assert attn.shape == (B, 1, S)
    assert bool(jnp.all(jnp.isfinite(pred)))
    print("KERNEL_OK")
</pallas_src>

<mosaic_0001>
module attributes {stable_mosaic.version = 11 : i64} {
  func.func @_key_proj_kernel(%arg0: i32, %arg1: memref<128x32xbf16, #tpu.memory_space<vmem>>, %arg2: memref<32x32xbf16, #tpu.memory_space<vmem>>, %arg3: memref<1x32xf32, #tpu.memory_space<vmem>>, %arg4: memref<128x32xbf16, #tpu.memory_space<vmem>>) attributes {dimension_semantics = [#tpu.dimension_semantics<parallel>], iteration_bounds = array<i64: 1>, scalar_prefetch = 0 : i64, scratch_operands = 0 : i64, tpu.core_type = #tpu.core_type<tc>, window_params = [{transform_indices = @transform_0, window_bounds = array<i64: 128, 32>}, {pipeline_mode = #tpu.pipeline_mode<synchronous>, transform_indices = @transform_1, window_bounds = array<i64: 32, 32>}, {pipeline_mode = #tpu.pipeline_mode<synchronous>, transform_indices = @transform_2, window_bounds = array<i64: 1, 32>}, {transform_indices = @transform_3, window_bounds = array<i64: 128, 32>}]} {
    %c0 = arith.constant 0 : index
    %c0_0 = arith.constant 0 : index
    %0 = vector.load %arg1[%c0, %c0_0] : memref<128x32xbf16, #tpu.memory_space<vmem>>, vector<128x32xbf16>
    %c0_1 = arith.constant 0 : index
    %c0_2 = arith.constant 0 : index
    %1 = vector.load %arg2[%c0_1, %c0_2] : memref<32x32xbf16, #tpu.memory_space<vmem>>, vector<32x32xbf16>
    %cst = arith.constant dense<0.000000e+00> : vector<128x32xf32>
    %2 = tpu.matmul %0, %1, %cst {dimension_numbers = #tpu.dot_dimension_numbers<[1], [0], [0], [1], [0, 0, 1, 1], [], []>} : vector<128x32xbf16>, vector<32x32xbf16>, vector<128x32xf32> -> vector<128x32xf32>
    %c0_3 = arith.constant 0 : index
    %c0_4 = arith.constant 0 : index
    %3 = vector.load %arg3[%c0_3, %c0_4] : memref<1x32xf32, #tpu.memory_space<vmem>>, vector<1x32xf32>
    %4 = vector.broadcast %3 : vector<1x32xf32> to vector<128x32xf32>
    %5 = arith.addf %2, %4 : vector<128x32xf32>
    %6 = arith.truncf %5 : vector<128x32xf32> to vector<128x32xbf16>
    %c0_5 = arith.constant 0 : index
    %c0_6 = arith.constant 0 : index
    %7 = vector.load %arg4[%c0_5, %c0_6] : memref<128x32xbf16, #tpu.memory_space<vmem>>, vector<128x32xbf16>
    tpu.vector_store %arg4[%c0_5, %c0_6], %6 {strides = array<i32>} : memref<128x32xbf16, #tpu.memory_space<vmem>>, vector<128x32xbf16>,
    return
  }
  func.func @transform_0(%arg0: i32) -> (i32, i32) {
    %c0_i32 = arith.constant 0 : i32
    %c0_i32_0 = arith.constant 0 : i32
    return %arg0, %c0_i32 : i32, i32
  }
  func.func @transform_1(%arg0: i32) -> (i32, i32) {
    %c0_i32 = arith.constant 0 : i32
    %c0_i32_0 = arith.constant 0 : i32
    %c0_i32_1 = arith.constant 0 : i32
    return %c0_i32, %c0_i32_0 : i32, i32
  }
  func.func @transform_2(%arg0: i32) -> (i32, i32) {
    %c0_i32 = arith.constant 0 : i32
    %c0_i32_0 = arith.constant 0 : i32
    %c0_i32_1 = arith.constant 0 : i32
    return %c0_i32, %c0_i32_0 : i32, i32
  }
  func.func @transform_3(%arg0: i32) -> (i32, i32) {
    %c0_i32 = arith.constant 0 : i32
    %c0_i32_0 = arith.constant 0 : i32
    return %arg0, %c0_i32 : i32, i32
  }
}

</mosaic_0001>

<llo_original>
// kernel: tpu_custom_call.1
$region0: #{tpu_custom_call.1}
  #allocation0 [shape = 'u32[]', space=smem, size = 0x4, offset = 0x4, fixed_abs, tag = 'smem constant byte address 0x4 - core index']
  #allocation1 [shape = 'u32[144,128]{1,0:T(1,128)}', space=vmem, size = 0x12000, scoped, tag = 'internal scratch']
  %s0 = inlined_call_operand.vmem [shape: bf16[128,32], index: 0, kind: input, shape index: {}]
  %s1 = inlined_call_operand.vmem [shape: bf16[32,32], index: 1, kind: input, shape index: {}]
  %s2 = inlined_call_operand.vmem [shape: f32[1,32], index: 2, kind: input, shape index: {}]
  %s3 = inlined_call_operand.vmem [shape: bf16[128,32], index: 3, kind: output, shape index: {}]
  %s4 = sld [smem:[#allocation0]]
  $region22: #{tpu_custom_call.1} parent=0
    _
  %s6 = ssub.s32 1, %s4
  %s7 = scalar_select 0, %s6, %s4
  // Predicated region
  $region2: #{tpu_custom_call.1} parent=0 // pred_check
    _
  $region3: #{tpu_custom_call.1} parent=0 // pred_check_branch
    %9 = sbr.rel (0) target = $region5
  $region4: #{tpu_custom_call.1} parent=0 // pred_region
    _
  $region5: #{tpu_custom_call.1} parent=0 // pred_fallthru
    _
  // Predicated region
  $region6: #{tpu_custom_call.1} parent=0 // pred_check
    _
  $region7: #{tpu_custom_call.1} parent=0 // pred_check_branch
    %11 = sbr.rel (0) target = $region9
  $region8: #{tpu_custom_call.1} parent=0 // pred_region
    _
  $region9: #{tpu_custom_call.1} parent=0 // pred_fallthru
    _
  // Predicated region
  $region10: #{tpu_custom_call.1} parent=0 // pred_check
    _
  $region11: #{tpu_custom_call.1} parent=0 // pred_check_branch
    %13 = sbr.rel (0) target = $region13
  $region12: #{tpu_custom_call.1} parent=0 // pred_region
    _
  $region13: #{tpu_custom_call.1} parent=0 // pred_fallthru
    _
  %v15 = vld [vmem:[%s0] sm:$0xf]
  %v16 = vld [vmem:[%s0 + $0x4] sm:$0xf]
  %v17 = vld [vmem:[%s0 + $0x8] sm:$0xf]
  %v18 = vld [vmem:[%s0 + $0xc] sm:$0xf]
  %v19 = vld [vmem:[%s0 + $0x10] sm:$0xf]
  %v20 = vld [vmem:[%s0 + $0x14] sm:$0xf]
  %v21 = vld [vmem:[%s0 + $0x18] sm:$0xf]
  %v22 = vld [vmem:[%s0 + $0x1c] sm:$0xf]
  %v23 = vld [vmem:[%s0 + $0x20] sm:$0xf]
  %v24 = vld [vmem:[%s0 + $0x24] sm:$0xf]
  %v25 = vld [vmem:[%s0 + $0x28] sm:$0xf]
  %v26 = vld [vmem:[%s0 + $0x2c] sm:$0xf]
  %v27 = vld [vmem:[%s0 + $0x30] sm:$0xf]
  %v28 = vld [vmem:[%s0 + $0x34] sm:$0xf]
  %v29 = vld [vmem:[%s0 + $0x38] sm:$0xf]
  %v30 = vld [vmem:[%s0 + $0x3c] sm:$0xf]
  %v31 = vld [vmem:[%s1] sm:$0xf]
  %v32 = vld [vmem:[%s1 + $0x4] sm:$0xf]
  %v33 = vld [vmem:[%s1 + $0x8] sm:$0xf]
  %v34 = vld [vmem:[%s1 + $0xc] sm:$0xf]
  %v35 = vld [vmem:[%s2] sm:$0x1]
  %v37 = vlaneseq
  %v38 = vshrl.u32 %v37, 7
  %v39 = vsub.s32 0, %v38
  %v40 = vrot.slane %v35, %v39
  %v58 = vunpack.c.l.b16 %v15
  %v59 = vunpack.c.l.b16 %v16
  %v60 = vunpack.c.l.b16 %v17
  %v61 = vunpack.c.l.b16 %v18
  %v62 = vunpack.c.l.b16 %v19
  %v63 = vunpack.c.l.b16 %v20
  %v64 = vunpack.c.l.b16 %v21
  %v65 = vunpack.c.l.b16 %v22
  %v66 = vunpack.c.l.b16 %v23
  %v67 = vunpack.c.l.b16 %v24
  %v68 = vunpack.c.l.b16 %v25
  %v69 = vunpack.c.l.b16 %v26
  %v70 = vunpack.c.l.b16 %v27
  %v71 = vunpack.c.l.b16 %v28
  %v72 = vunpack.c.l.b16 %v29
  %v73 = vunpack.c.l.b16 %v30
  %v74 = vpack.c.b16 %v59, %v58
  %v75 = vpack.c.b16 %v61, %v60
  %v76 = vpack.c.b16 %v63, %v62
  %v77 = vpack.c.b16 %v65, %v64
  %v78 = vpack.c.b16 %v67, %v66
  %v79 = vpack.c.b16 %v69, %v68
  %v80 = vpack.c.b16 %v71, %v70
  %v81 = vpack.c.b16 %v73, %v72
  %v86 = vunpack.c.l.b16 %v31
  %v87 = vunpack.c.l.b16 %v32
  %v88 = vunpack.c.l.b16 %v33
  %v89 = vunpack.c.l.b16 %v34
  %v90 = vpack.c.b16 %v87, %v86
  %v91 = vpack.c.b16 %v89, %v88
  %vm94 = vcmask 261120
  %v96 = vsel %vm94, %v74, 0
  %v99 = vsel %vm94, %v75, 0
  %v102 = vsel %vm94, %v76, 0
  %v105 = vsel %vm94, %v77, 0
  %v108 = vsel %vm94, %v78, 0
  %v111 = vsel %vm94, %v79, 0
  %v114 = vsel %vm94, %v80, 0
  %v117 = vsel %vm94, %v81, 0
  %119 = vmatprep.subr.bf16.mxu0 0
  %120 = vmatpush1.bf16.msra.mxu0 %v90
  %121 = vmatprep.subr.bf16.mxu0 0
  %122 = vmatpush1.bf16.msra.mxu0 %v91
  %123 = vmatprep.subr.bf16.mxu0 0
  %124 = vmatpush1.bf16.msra.mxu0 0
  %125 = vmatprep.subr.bf16.mxu0 0
  %126 = vmatpush1.bf16.msra.mxu0 0
  %127 = vmatprep.subr.bf16.mxu0 0
  %128 = vmatpush1.bf16.msra.mxu0 0
  %129 = vmatprep.subr.bf16.mxu0 0
  %130 = vmatpush1.bf16.msra.mxu0 0
  %131 = vmatprep.subr.bf16.mxu0 0
  %132 = vmatpush1.bf16.msra.mxu0 0
  %133 = vmatprep.subr.bf16.mxu0 0
  %134 = vmatpush1.bf16.msra.mxu0 0
  %135 = vmatprep.subr.bf16.mxu0 0
  %136 = vmatpush1.bf16.msra.mxu0 0
  %137 = vmatprep.subr.bf16.mxu0 0
  %138 = vmatpush1.bf16.msra.mxu0 0
  %139 = vmatprep.subr.bf16.mxu0 0
  %140 = vmatpush1.bf16.msra.mxu0 0
  %141 = vmatprep.subr.bf16.mxu0 0
  %142 = vmatpush1.bf16.msra.mxu0 0
  %143 = vmatprep.subr.bf16.mxu0 0
  %144 = vmatpush1.bf16.msra.mxu0 0
  %145 = vmatprep.subr.bf16.mxu0 0
  %146 = vmatpush1.bf16.msra.mxu0 0
  %147 = vmatprep.subr.bf16.mxu0 0
  %148 = vmatpush1.bf16.msra.mxu0 0
  %149 = vmatprep.subr.bf16.mxu0 0
  %150 = vmatpush1.bf16.msra.mxu0 0
  %151 = vmatprep.mubr.bf16.mxu0 0
  %152 = vmatmul.mubr.bf16.gmra.mrb[0].mxu0 %v96
  %v153 = vpop.f32.mrb[0].mxu0
  %v154 = vadd.f32 %v40, %v153
  %v155 = vpop.f32.mrb[0].mxu0
  %v156 = vpop.f32.mrb[0].mxu0
  %v157 = vadd.f32 %v40, %v156
  %v158 = vpop.f32.mrb[0].mxu0
  %159 = vmatprep.mubr.bf16.mxu0 0
  %160 = vmatmul.mubr.bf16.gmra.mrb[0].mxu0 %v99
  %v161 = vpop.f32.mrb[0].mxu0
  %v162 = vadd.f32 %v40, %v161
  %v163 = vpop.f32.mrb[0].mxu0
  %v164 = vpop.f32.mrb[0].mxu0
  %v165 = vadd.f32 %v40, %v164
  %v166 = vpop.f32.mrb[0].mxu0
  %167 = vmatprep.mubr.bf16.mxu0 0
  %168 = vmatmul.mubr.bf16.gmra.mrb[0].mxu0 %v102
  %v169 = vpop.f32.mrb[0].mxu0
  %v170 = vadd.f32 %v40, %v169
  %v171 = vpop.f32.mrb[0].mxu0
  %v172 = vpop.f32.mrb[0].mxu0
  %v173 = vadd.f32 %v40, %v172
  %v174 = vpop.f32.mrb[0].mxu0
  %175 = vmatprep.mubr.bf16.mxu0 0
  %176 = vmatmul.mubr.bf16.gmra.mrb[0].mxu0 %v105
  %v177 = vpop.f32.mrb[0].mxu0
  %v178 = vadd.f32 %v40, %v177
  %v179 = vpop.f32.mrb[0].mxu0
  %v180 = vpop.f32.mrb[0].mxu0
  %v181 = vadd.f32 %v40, %v180
  %v182 = vpop.f32.mrb[0].mxu0
  %183 = vmatprep.mubr.bf16.mxu0 0
  %184 = vmatmul.mubr.bf16.gmra.mrb[0].mxu0 %v108
  %v185 = vpop.f32.mrb[0].mxu0
  %v186 = vadd.f32 %v40, %v185
  %v187 = vpop.f32.mrb[0].mxu0
  %v188 = vpop.f32.mrb[0].mxu0
  %v189 = vadd.f32 %v40, %v188
  %v190 = vpop.f32.mrb[0].mxu0
  %191 = vmatprep.mubr.bf16.mxu0 0
  %192 = vmatmul.mubr.bf16.gmra.mrb[0].mxu0 %v111
  %v193 = vpop.f32.mrb[0].mxu0
  %v194 = vadd.f32 %v40, %v193
  %v195 = vpop.f32.mrb[0].mxu0
  %v196 = vpop.f32.mrb[0].mxu0
  %v197 = vadd.f32 %v40, %v196
  %v198 = vpop.f32.mrb[0].mxu0
  %199 = vmatprep.mubr.bf16.mxu0 0
  %200 = vmatmul.mubr.bf16.gmra.mrb[0].mxu0 %v114
  %v201 = vpop.f32.mrb[0].mxu0
  %v202 = vadd.f32 %v40, %v201
  %v203 = vpop.f32.mrb[0].mxu0
  %v204 = vpop.f32.mrb[0].mxu0
  %v205 = vadd.f32 %v40, %v204
  %v206 = vpop.f32.mrb[0].mxu0
  %207 = vmatprep.mubr.bf16.mxu0 0
  %208 = vmatmul.mubr.bf16.gmra.mrb[0].mxu0 %v117
  %v209 = vpop.f32.mrb[0].mxu0
  %v210 = vadd.f32 %v40, %v209
  %v211 = vpop.f32.mrb[0].mxu0
  %v212 = vpop.f32.mrb[0].mxu0
  %v213 = vadd.f32 %v40, %v212
  %v214 = vpop.f32.mrb[0].mxu0
  %215 = vdwg.mxu0
  %v216 = vpack.c.bf16 %v157, %v154
  %v217 = vpack.c.bf16 %v165, %v162
  %v218 = vpack.c.bf16 %v173, %v170
  %v219 = vpack.c.bf16 %v181, %v178
  %v220 = vpack.c.bf16 %v189, %v186
  %v221 = vpack.c.bf16 %v197, %v194
  %v222 = vpack.c.bf16 %v205, %v202
  %v223 = vpack.c.bf16 %v213, %v210
  %v232 = vunpack.c.l.b16 %v216
  %v233 = vunpack.c.h.b16 %v216
  %v234 = vunpack.c.l.b16 %v217
  %v235 = vunpack.c.h.b16 %v217
  %v236 = vunpack.c.l.b16 %v218
  %v237 = vunpack.c.h.b16 %v218
  %v238 = vunpack.c.l.b16 %v219
  %v239 = vunpack.c.h.b16 %v219
  %v240 = vunpack.c.l.b16 %v220
  %v241 = vunpack.c.h.b16 %v220
  %v242 = vunpack.c.l.b16 %v221
  %v243 = vunpack.c.h.b16 %v221
  %v244 = vunpack.c.l.b16 %v222
  %v245 = vunpack.c.h.b16 %v222
  %v246 = vunpack.c.l.b16 %v223
  %v247 = vunpack.c.h.b16 %v223
  %v248 = vpack.c.b16 %v232, %v232
  %v249 = vpack.c.b16 %v233, %v233
  %v250 = vpack.c.b16 %v234, %v234
  %v251 = vpack.c.b16 %v235, %v235
  %v252 = vpack.c.b16 %v236, %v236
  %v253 = vpack.c.b16 %v237, %v237
  %v254 = vpack.c.b16 %v238, %v238
  %v255 = vpack.c.b16 %v239, %v239
  %v256 = vpack.c.b16 %v240, %v240
  %v257 = vpack.c.b16 %v241, %v241
  %v258 = vpack.c.b16 %v242, %v242
  %v259 = vpack.c.b16 %v243, %v243
  %v260 = vpack.c.b16 %v244, %v244
  %v261 = vpack.c.b16 %v245, %v245
  %v262 = vpack.c.b16 %v246, %v246
  %v263 = vpack.c.b16 %v247, %v247
  %vm280 = vcmask 257024
  %281 = vst.msk [vmem:[%s3] sm:$0xf] %vm280, %v248
  %282 = vst.msk [vmem:[%s3 + $0x4] sm:$0xf] %vm280, %v249
  %283 = vst.msk [vmem:[%s3 + $0x8] sm:$0xf] %vm280, %v250
  %284 = vst.msk [vmem:[%s3 + $0xc] sm:$0xf] %vm280, %v251
  %285 = vst.msk [vmem:[%s3 + $0x10] sm:$0xf] %vm280, %v252
  %286 = vst.msk [vmem:[%s3 + $0x14] sm:$0xf] %vm280, %v253
  %287 = vst.msk [vmem:[%s3 + $0x18] sm:$0xf] %vm280, %v254
  %288 = vst.msk [vmem:[%s3 + $0x1c] sm:$0xf] %vm280, %v255
  %289 = vst.msk [vmem:[%s3 + $0x20] sm:$0xf] %vm280, %v256
  %290 = vst.msk [vmem:[%s3 + $0x24] sm:$0xf] %vm280, %v257
  %291 = vst.msk [vmem:[%s3 + $0x28] sm:$0xf] %vm280, %v258
  %292 = vst.msk [vmem:[%s3 + $0x2c] sm:$0xf] %vm280, %v259
  %293 = vst.msk [vmem:[%s3 + $0x30] sm:$0xf] %vm280, %v260
  %294 = vst.msk [vmem:[%s3 + $0x34] sm:$0xf] %vm280, %v261
  %295 = vst.msk [vmem:[%s3 + $0x38] sm:$0xf] %vm280, %v262
  %296 = vst.msk [vmem:[%s3 + $0x3c] sm:$0xf] %vm280, %v263
  // Predicated region
  $region14: #{tpu_custom_call.1} parent=0 // pred_check
    _
  $region15: #{tpu_custom_call.1} parent=0 // pred_check_branch
    %298 = sbr.rel (0) target = $region17
  $region16: #{tpu_custom_call.1} parent=0 // pred_region
    _
  $region17: #{tpu_custom_call.1} parent=0 // pred_fallthru
    _
  // Predicated region
  $region18: #{tpu_custom_call.1} parent=0 // pred_check
    _
  $region19: #{tpu_custom_call.1} parent=0 // pred_check_branch
    %300 = sbr.rel (0) target = $region21
  $region20: #{tpu_custom_call.1} parent=0 // pred_region
    _
  $region21: #{tpu_custom_call.1} parent=0 // pred_fallthru
    _

</llo_original>
